<compile_context>
chip_gen: v5e
topology: v5e:2x2
jax: 0.10.0
libtpu: 0.0.40
codegen_flags: <defaults>
</compile_context>

<pallas_src>
import functools

import jax
import jax.numpy as jnp
from jax.experimental import pallas as pl
from jax.experimental.pallas import tpu as pltpu


def _round_up(v, m):
    return ((v + m - 1) // m) * m


def _conv_kernel(x_ref, w_ref, b_ref, o_ref, acc_ref, *, b_tile, K, Wp, L_out):
    # x_ref  : (b_tile, C_in, S_in)    channel-major, flattened padded spatial
    # w_ref  : (K*K, C_out, C_in)      one slice per conv tap
    # b_ref  : (C_out, 1)
    # o_ref  : (b_tile, C_out, L_out)  flattened output rows (lane-dense)
    # acc_ref: (b_tile, C_out, L_out)  f32 scratch accumulator
    for t in range(K * K):
        kh, kw = divmod(t, K)
        off = kh * Wp + kw
        wk = w_ref[t]                                   # (C_out, C_in) - loaded once per tap
        for b in range(b_tile):
            xs = x_ref[b, :, pl.ds(off, L_out)]         # (C_in, L_out), static slice
            contrib = jnp.dot(wk, xs, preferred_element_type=jnp.float32)
            if t == 0:
                acc_ref[b] = contrib                    # first tap initializes
            else:
                acc_ref[b] += contrib
    # Single vectorized bias-add + cast + lane-dense store for the whole block.
    bias = b_ref[...].astype(jnp.float32)               # (C_out, 1)
    o_ref[...] = (acc_ref[...] + bias[None]).astype(o_ref.dtype)


def conv_layer_forward(x, w, b, *, kernel_size=3, stride=1, padding=1, b_tile=None):
    """x: (N, C, H, W); w: (C_out, C_in, K, K); b: (C_out,).

    Returns (conv2d(x), weight.view(C_out, C_in, K*K).permute(0, 2, 1)),
    matching ConvLayer.forward.
    """
    N, C, H, W = x.shape
    C_out, C_in, Kh, Kw = w.shape
    assert C_in == C and Kh == kernel_size and Kw == kernel_size
    # TODO(synk): stride > 1 not implemented (module default is stride=1).
    assert stride == 1, "only stride=1 is supported"

    K = kernel_size
    p = padding
    Hp, Wp = H + 2 * p, W + 2 * p
    H_out = Hp - K + 1
    W_out = Wp - K + 1

    itemsize = jnp.dtype(x.dtype).itemsize
    L_out = _round_up(H_out * Wp, 128)           # lane-dense output length
    o_max = (K - 1) * Wp + (K - 1)               # largest tap offset
    S_in = L_out + o_max                         # per-image flat input length

    # Batch tile: target ~1 MiB of input per grid step, keep >= 2 grid steps.
    if b_tile is None:
        per_image_bytes = C * S_in * itemsize
        b_tile = min(8, max(1, (1 << 20) // max(per_image_bytes, 1)), max(1, (N + 1) // 2))
    b_tile = max(1, min(b_tile, N))
    n_tiles = (N + b_tile - 1) // b_tile
    N_pad = n_tiles * b_tile

    # Wrapper-side layout plumbing (pure XLA, cheap):
    #   pad spatially + pad batch, flatten spatial, pad flat dim for tap reads.
    x_pad = jnp.pad(x, ((0, N_pad - N), (0, 0), (p, p), (p, p)))
    x_flat = x_pad.reshape(N_pad, C, Hp * Wp)
    x_flat = jnp.pad(x_flat, ((0, 0), (0, 0), (0, S_in - Hp * Wp)))

    w_flat = jnp.transpose(w.reshape(C_out, C_in, K * K), (2, 0, 1))  # (K*K, C_out, C_in)
    b_col = b.reshape(C_out, 1)

    kernel = functools.partial(_conv_kernel, b_tile=b_tile, K=K, Wp=Wp, L_out=L_out)

    # VMEM budget: double-buffered in/out blocks + resident params + f32 accumulator.
    blk_in = b_tile * C * S_in * itemsize
    blk_out = b_tile * C_out * L_out * itemsize
    params = (K * K * C_out * C_in + C_out) * jnp.dtype(w.dtype).itemsize
    acc_bytes = b_tile * C_out * L_out * 4
    need = 2 * (blk_in + blk_out) + params + acc_bytes
    vmem_limit = int(min(max(2 * need + (4 << 20), 16 << 20), 48 << 20))

    out_flat = pl.pallas_call(
        kernel,
        out_shape=jax.ShapeDtypeStruct((N_pad, C_out, L_out), x.dtype),
        grid_spec=pltpu.PrefetchScalarGridSpec(
            num_scalar_prefetch=0,
            grid=(n_tiles,),
            in_specs=[
                pl.BlockSpec((b_tile, C, S_in), lambda t: (t, 0, 0)),     # x tile
                pl.BlockSpec((K * K, C_out, C_in), lambda t: (0, 0, 0)),  # weights (resident)
                pl.BlockSpec((C_out, 1), lambda t: (0, 0)),               # bias (resident)
            ],
            out_specs=pl.BlockSpec((b_tile, C_out, L_out), lambda t: (t, 0, 0)),
            scratch_shapes=[pltpu.VMEM((b_tile, C_out, L_out), jnp.float32)],
        ),
        compiler_params=pltpu.CompilerParams(
            dimension_semantics=("parallel",),
            vmem_limit_bytes=vmem_limit,
        ),
    )(x_flat, w_flat, b_col)

    # Drop padded batch rows, the rounded-up tail and the garbage columns.
    y = out_flat[:N, :, : H_out * Wp].reshape(N, C_out, H_out, Wp)[:, :, :, :W_out]

    # Second forward output: weight.view(C_out, C_in, K*K).permute(0, 2, 1).
    w_perm = jnp.transpose(w.reshape(C_out, C_in, K * K), (0, 2, 1))
    return y, w_perm


def _reference(x, w, b):
    y = jax.lax.conv_general_dilated(
        x, w, window_strides=(1, 1), padding=((1, 1), (1, 1)),
        dimension_numbers=("NCHW", "OIHW", "NCHW"),
        precision=jax.lax.Precision.HIGHEST,
    )
    return y + b[None, :, None, None]


if __name__ == "__main__":
    key = jax.random.PRNGKey(0)
    kx, kw, kb = jax.random.split(key, 3)

    N, C, H, W = 2, 4, 16, 16
    K = 3
    x = jax.random.normal(kx, (N, C, H, W), dtype=jnp.float32)
    w = jax.random.normal(kw, (C, C, K, K), dtype=jnp.float32) * 0.1
    b = jax.random.normal(kb, (C,), dtype=jnp.float32) * 0.1

    y, w_perm = conv_layer_forward(x, w, b, kernel_size=K, stride=1, padding=1)
    y = jax.block_until_ready(y)

    y_ref = _reference(x, w, b)
    assert y.shape == (N, C, H, W)
    assert w_perm.shape == (C, K * K, C)
    assert jnp.allclose(y, y_ref, atol=1e-3, rtol=1e-3), "mismatch vs reference"
    assert jnp.allclose(
        w_perm, jnp.transpose(w.reshape(C, C, K * K), (0, 2, 1))
    ), "weight permute mismatch"

    print("KERNEL_OK")
</pallas_src>

<mosaic_0001>
module attributes {stable_mosaic.version = 11 : i64} {
  func.func @_conv_kernel(%arg0: i32, %arg1: memref<1x4x422xf32, #tpu.memory_space<vmem>>, %arg2: memref<9x4x4xf32, #tpu.memory_space<vmem>>, %arg3: memref<4x1xf32, #tpu.memory_space<vmem>>, %arg4: memref<1x4x384xf32, #tpu.memory_space<vmem>>, %arg5: memref<1x4x384xf32, #tpu.memory_space<vmem>>) attributes {dimension_semantics = [#tpu.dimension_semantics<parallel>], iteration_bounds = array<i64: 2>, scalar_prefetch = 0 : i64, scratch_operands = 1 : i64, tpu.core_type = #tpu.core_type<tc>, window_params = [{transform_indices = @transform_0, window_bounds = array<i64: 1, 4, 422>}, {pipeline_mode = #tpu.pipeline_mode<synchronous>, transform_indices = @transform_1, window_bounds = array<i64: 9, 4, 4>}, {pipeline_mode = #tpu.pipeline_mode<synchronous>, transform_indices = @transform_2, window_bounds = array<i64: 4, 1>}, {transform_indices = @transform_3, window_bounds = array<i64: 1, 4, 384>}]} {
    %c0 = arith.constant 0 : index
    %c0_0 = arith.constant 0 : index
    %c0_1 = arith.constant 0 : index
    %0 = vector.load %arg2[%c0, %c0_0, %c0_1] : memref<9x4x4xf32, #tpu.memory_space<vmem>>, vector<1x4x4xf32>
    %1 = vector.shape_cast %0 : vector<1x4x4xf32> to vector<4x4xf32>
    %c0_2 = arith.constant 0 : index
    %c0_3 = arith.constant 0 : index
    %c0_4 = arith.constant 0 : index
    %2 = vector.load %arg1[%c0_2, %c0_3, %c0_4] : memref<1x4x422xf32, #tpu.memory_space<vmem>>, vector<1x4x384xf32>
    %3 = vector.shape_cast %2 : vector<1x4x384xf32> to vector<4x384xf32>
    %cst = arith.constant dense<0.000000e+00> : vector<4x384xf32>
    %4 = tpu.matmul %1, %3, %cst {dimension_numbers = #tpu.dot_dimension_numbers<[1], [0], [0], [1], [0, 0, 1, 1], [], []>} : vector<4x4xf32>, vector<4x384xf32>, vector<4x384xf32> -> vector<4x384xf32>
    %c0_5 = arith.constant 0 : index
    %c0_6 = arith.constant 0 : index
    %c0_7 = arith.constant 0 : index
    %5 = vector.load %arg5[%c0_5, %c0_6, %c0_7] : memref<1x4x384xf32, #tpu.memory_space<vmem>>, vector<1x4x384xf32>
    %6 = vector.shape_cast %5 : vector<1x4x384xf32> to vector<4x384xf32>
    %7 = vector.shape_cast %4 : vector<4x384xf32> to vector<1x4x384xf32>
    tpu.vector_store %arg5[%c0_5, %c0_6, %c0_7], %7 {strides = array<i32>} : memref<1x4x384xf32, #tpu.memory_space<vmem>>, vector<1x4x384xf32>,
    %c1 = arith.constant 1 : index
    %c0_8 = arith.constant 0 : index
    %c0_9 = arith.constant 0 : index
    %8 = vector.load %arg2[%c1, %c0_8, %c0_9] : memref<9x4x4xf32, #tpu.memory_space<vmem>>, vector<1x4x4xf32>
    %9 = vector.shape_cast %8 : vector<1x4x4xf32> to vector<4x4xf32>
    %c0_10 = arith.constant 0 : index
    %c0_11 = arith.constant 0 : index
    %c1_12 = arith.constant 1 : index
    %10 = vector.load %arg1[%c0_10, %c0_11, %c1_12] : memref<1x4x422xf32, #tpu.memory_space<vmem>>, vector<1x4x384xf32>
    %11 = vector.shape_cast %10 : vector<1x4x384xf32> to vector<4x384xf32>
    %cst_13 = arith.constant dense<0.000000e+00> : vector<4x384xf32>
    %12 = tpu.matmul %9, %11, %cst_13 {dimension_numbers = #tpu.dot_dimension_numbers<[1], [0], [0], [1], [0, 0, 1, 1], [], []>} : vector<4x4xf32>, vector<4x384xf32>, vector<4x384xf32> -> vector<4x384xf32>
    %c0_14 = arith.constant 0 : index
    %c0_15 = arith.constant 0 : index
    %c0_16 = arith.constant 0 : index
    %13 = vector.load %arg5[%c0_14, %c0_15, %c0_16] : memref<1x4x384xf32, #tpu.memory_space<vmem>>, vector<1x4x384xf32>
    %14 = vector.shape_cast %13 : vector<1x4x384xf32> to vector<4x384xf32>
    %15 = arith.addf %14, %12 : vector<4x384xf32>
    %c0_17 = arith.constant 0 : index
    %c0_18 = arith.constant 0 : index
    %c0_19 = arith.constant 0 : index
    %16 = vector.load %arg5[%c0_17, %c0_18, %c0_19] : memref<1x4x384xf32, #tpu.memory_space<vmem>>, vector<1x4x384xf32>
    %17 = vector.shape_cast %16 : vector<1x4x384xf32> to vector<4x384xf32>
    %18 = vector.shape_cast %15 : vector<4x384xf32> to vector<1x4x384xf32>
    tpu.vector_store %arg5[%c0_17, %c0_18, %c0_19], %18 {strides = array<i32>} : memref<1x4x384xf32, #tpu.memory_space<vmem>>, vector<1x4x384xf32>,
    %c2 = arith.constant 2 : index
    %c0_20 = arith.constant 0 : index
    %c0_21 = arith.constant 0 : index
    %19 = vector.load %arg2[%c2, %c0_20, %c0_21] : memref<9x4x4xf32, #tpu.memory_space<vmem>>, vector<1x4x4xf32>
    %20 = vector.shape_cast %19 : vector<1x4x4xf32> to vector<4x4xf32>
    %c0_22 = arith.constant 0 : index
    %c0_23 = arith.constant 0 : index
    %c2_24 = arith.constant 2 : index
    %21 = vector.load %arg1[%c0_22, %c0_23, %c2_24] : memref<1x4x422xf32, #tpu.memory_space<vmem>>, vector<1x4x384xf32>
    %22 = vector.shape_cast %21 : vector<1x4x384xf32> to vector<4x384xf32>
    %cst_25 = arith.constant dense<0.000000e+00> : vector<4x384xf32>
    %23 = tpu.matmul %20, %22, %cst_25 {dimension_numbers = #tpu.dot_dimension_numbers<[1], [0], [0], [1], [0, 0, 1, 1], [], []>} : vector<4x4xf32>, vector<4x384xf32>, vector<4x384xf32> -> vector<4x384xf32>
    %c0_26 = arith.constant 0 : index
    %c0_27 = arith.constant 0 : index
    %c0_28 = arith.constant 0 : index
    %24 = vector.load %arg5[%c0_26, %c0_27, %c0_28] : memref<1x4x384xf32, #tpu.memory_space<vmem>>, vector<1x4x384xf32>
    %25 = vector.shape_cast %24 : vector<1x4x384xf32> to vector<4x384xf32>
    %26 = arith.addf %25, %23 : vector<4x384xf32>
    %c0_29 = arith.constant 0 : index
    %c0_30 = arith.constant 0 : index
    %c0_31 = arith.constant 0 : index
    %27 = vector.load %arg5[%c0_29, %c0_30, %c0_31] : memref<1x4x384xf32, #tpu.memory_space<vmem>>, vector<1x4x384xf32>
    %28 = vector.shape_cast %27 : vector<1x4x384xf32> to vector<4x384xf32>
    %29 = vector.shape_cast %26 : vector<4x384xf32> to vector<1x4x384xf32>
    tpu.vector_store %arg5[%c0_29, %c0_30, %c0_31], %29 {strides = array<i32>} : memref<1x4x384xf32, #tpu.memory_space<vmem>>, vector<1x4x384xf32>,
    %c3 = arith.constant 3 : index
    %c0_32 = arith.constant 0 : index
    %c0_33 = arith.constant 0 : index
    %30 = vector.load %arg2[%c3, %c0_32, %c0_33] : memref<9x4x4xf32, #tpu.memory_space<vmem>>, vector<1x4x4xf32>
    %31 = vector.shape_cast %30 : vector<1x4x4xf32> to vector<4x4xf32>
    %c0_34 = arith.constant 0 : index
    %c0_35 = arith.constant 0 : index
    %c18 = arith.constant 18 : index
    %32 = vector.load %arg1[%c0_34, %c0_35, %c18] : memref<1x4x422xf32, #tpu.memory_space<vmem>>, vector<1x4x384xf32>
    %33 = vector.shape_cast %32 : vector<1x4x384xf32> to vector<4x384xf32>
    %cst_36 = arith.constant dense<0.000000e+00> : vector<4x384xf32>
    %34 = tpu.matmul %31, %33, %cst_36 {dimension_numbers = #tpu.dot_dimension_numbers<[1], [0], [0], [1], [0, 0, 1, 1], [], []>} : vector<4x4xf32>, vector<4x384xf32>, vector<4x384xf32> -> vector<4x384xf32>
    %c0_37 = arith.constant 0 : index
    %c0_38 = arith.constant 0 : index
    %c0_39 = arith.constant 0 : index
    %35 = vector.load %arg5[%c0_37, %c0_38, %c0_39] : memref<1x4x384xf32, #tpu.memory_space<vmem>>, vector<1x4x384xf32>
    %36 = vector.shape_cast %35 : vector<1x4x384xf32> to vector<4x384xf32>
    %37 = arith.addf %36, %34 : vector<4x384xf32>
    %c0_40 = arith.constant 0 : index
    %c0_41 = arith.constant 0 : index
    %c0_42 = arith.constant 0 : index
    %38 = vector.load %arg5[%c0_40, %c0_41, %c0_42] : memref<1x4x384xf32, #tpu.memory_space<vmem>>, vector<1x4x384xf32>
    %39 = vector.shape_cast %38 : vector<1x4x384xf32> to vector<4x384xf32>
    %40 = vector.shape_cast %37 : vector<4x384xf32> to vector<1x4x384xf32>
    tpu.vector_store %arg5[%c0_40, %c0_41, %c0_42], %40 {strides = array<i32>} : memref<1x4x384xf32, #tpu.memory_space<vmem>>, vector<1x4x384xf32>,
    %c4 = arith.constant 4 : index
    %c0_43 = arith.constant 0 : index
    %c0_44 = arith.constant 0 : index
    %41 = vector.load %arg2[%c4, %c0_43, %c0_44] : memref<9x4x4xf32, #tpu.memory_space<vmem>>, vector<1x4x4xf32>
    %42 = vector.shape_cast %41 : vector<1x4x4xf32> to vector<4x4xf32>
    %c0_45 = arith.constant 0 : index
    %c0_46 = arith.constant 0 : index
    %c19 = arith.constant 19 : index
    %43 = vector.load %arg1[%c0_45, %c0_46, %c19] : memref<1x4x422xf32, #tpu.memory_space<vmem>>, vector<1x4x384xf32>
    %44 = vector.shape_cast %43 : vector<1x4x384xf32> to vector<4x384xf32>
    %cst_47 = arith.constant dense<0.000000e+00> : vector<4x384xf32>
    %45 = tpu.matmul %42, %44, %cst_47 {dimension_numbers = #tpu.dot_dimension_numbers<[1], [0], [0], [1], [0, 0, 1, 1], [], []>} : vector<4x4xf32>, vector<4x384xf32>, vector<4x384xf32> -> vector<4x384xf32>
    %c0_48 = arith.constant 0 : index
    %c0_49 = arith.constant 0 : index
    %c0_50 = arith.constant 0 : index
    %46 = vector.load %arg5[%c0_48, %c0_49, %c0_50] : memref<1x4x384xf32, #tpu.memory_space<vmem>>, vector<1x4x384xf32>
    %47 = vector.shape_cast %46 : vector<1x4x384xf32> to vector<4x384xf32>
    %48 = arith.addf %47, %45 : vector<4x384xf32>
    %c0_51 = arith.constant 0 : index
    %c0_52 = arith.constant 0 : index
    %c0_53 = arith.constant 0 : index
    %49 = vector.load %arg5[%c0_51, %c0_52, %c0_53] : memref<1x4x384xf32, #tpu.memory_space<vmem>>, vector<1x4x384xf32>
    %50 = vector.shape_cast %49 : vector<1x4x384xf32> to vector<4x384xf32>
    %51 = vector.shape_cast %48 : vector<4x384xf32> to vector<1x4x384xf32>
    tpu.vector_store %arg5[%c0_51, %c0_52, %c0_53], %51 {strides = array<i32>} : memref<1x4x384xf32, #tpu.memory_space<vmem>>, vector<1x4x384xf32>,
    %c5 = arith.constant 5 : index
    %c0_54 = arith.constant 0 : index
    %c0_55 = arith.constant 0 : index
    %52 = vector.load %arg2[%c5, %c0_54, %c0_55] : memref<9x4x4xf32, #tpu.memory_space<vmem>>, vector<1x4x4xf32>
    %53 = vector.shape_cast %52 : vector<1x4x4xf32> to vector<4x4xf32>
    %c0_56 = arith.constant 0 : index
    %c0_57 = arith.constant 0 : index
    %c20 = arith.constant 20 : index
    %54 = vector.load %arg1[%c0_56, %c0_57, %c20] : memref<1x4x422xf32, #tpu.memory_space<vmem>>, vector<1x4x384xf32>
    %55 = vector.shape_cast %54 : vector<1x4x384xf32> to vector<4x384xf32>
    %cst_58 = arith.constant dense<0.000000e+00> : vector<4x384xf32>
    %56 = tpu.matmul %53, %55, %cst_58 {dimension_numbers = #tpu.dot_dimension_numbers<[1], [0], [0], [1], [0, 0, 1, 1], [], []>} : vector<4x4xf32>, vector<4x384xf32>, vector<4x384xf32> -> vector<4x384xf32>
    %c0_59 = arith.constant 0 : index
    %c0_60 = arith.constant 0 : index
    %c0_61 = arith.constant 0 : index
    %57 = vector.load %arg5[%c0_59, %c0_60, %c0_61] : memref<1x4x384xf32, #tpu.memory_space<vmem>>, vector<1x4x384xf32>
    %58 = vector.shape_cast %57 : vector<1x4x384xf32> to vector<4x384xf32>
    %59 = arith.addf %58, %56 : vector<4x384xf32>
    %c0_62 = arith.constant 0 : index
    %c0_63 = arith.constant 0 : index
    %c0_64 = arith.constant 0 : index
    %60 = vector.load %arg5[%c0_62, %c0_63, %c0_64] : memref<1x4x384xf32, #tpu.memory_space<vmem>>, vector<1x4x384xf32>
    %61 = vector.shape_cast %60 : vector<1x4x384xf32> to vector<4x384xf32>
    %62 = vector.shape_cast %59 : vector<4x384xf32> to vector<1x4x384xf32>
    tpu.vector_store %arg5[%c0_62, %c0_63, %c0_64], %62 {strides = array<i32>} : memref<1x4x384xf32, #tpu.memory_space<vmem>>, vector<1x4x384xf32>,
    %c6 = arith.constant 6 : index
    %c0_65 = arith.constant 0 : index
    %c0_66 = arith.constant 0 : index
    %63 = vector.load %arg2[%c6, %c0_65, %c0_66] : memref<9x4x4xf32, #tpu.memory_space<vmem>>, vector<1x4x4xf32>
    %64 = vector.shape_cast %63 : vector<1x4x4xf32> to vector<4x4xf32>
    %c0_67 = arith.constant 0 : index
    %c0_68 = arith.constant 0 : index
    %c36 = arith.constant 36 : index
    %65 = vector.load %arg1[%c0_67, %c0_68, %c36] : memref<1x4x422xf32, #tpu.memory_space<vmem>>, vector<1x4x384xf32>
    %66 = vector.shape_cast %65 : vector<1x4x384xf32> to vector<4x384xf32>
    %cst_69 = arith.constant dense<0.000000e+00> : vector<4x384xf32>
    %67 = tpu.matmul %64, %66, %cst_69 {dimension_numbers = #tpu.dot_dimension_numbers<[1], [0], [0], [1], [0, 0, 1, 1], [], []>} : vector<4x4xf32>, vector<4x384xf32>, vector<4x384xf32> -> vector<4x384xf32>
    %c0_70 = arith.constant 0 : index
    %c0_71 = arith.constant 0 : index
    %c0_72 = arith.constant 0 : index
    %68 = vector.load %arg5[%c0_70, %c0_71, %c0_72] : memref<1x4x384xf32, #tpu.memory_space<vmem>>, vector<1x4x384xf32>
    %69 = vector.shape_cast %68 : vector<1x4x384xf32> to vector<4x384xf32>
    %70 = arith.addf %69, %67 : vector<4x384xf32>
    %c0_73 = arith.constant 0 : index
    %c0_74 = arith.constant 0 : index
    %c0_75 = arith.constant 0 : index
    %71 = vector.load %arg5[%c0_73, %c0_74, %c0_75] : memref<1x4x384xf32, #tpu.memory_space<vmem>>, vector<1x4x384xf32>
    %72 = vector.shape_cast %71 : vector<1x4x384xf32> to vector<4x384xf32>
    %73 = vector.shape_cast %70 : vector<4x384xf32> to vector<1x4x384xf32>
    tpu.vector_store %arg5[%c0_73, %c0_74, %c0_75], %73 {strides = array<i32>} : memref<1x4x384xf32, #tpu.memory_space<vmem>>, vector<1x4x384xf32>,
    %c7 = arith.constant 7 : index
    %c0_76 = arith.constant 0 : index
    %c0_77 = arith.constant 0 : index
    %74 = vector.load %arg2[%c7, %c0_76, %c0_77] : memref<9x4x4xf32, #tpu.memory_space<vmem>>, vector<1x4x4xf32>
    %75 = vector.shape_cast %74 : vector<1x4x4xf32> to vector<4x4xf32>
    %c0_78 = arith.constant 0 : index
    %c0_79 = arith.constant 0 : index
    %c37 = arith.constant 37 : index
    %76 = vector.load %arg1[%c0_78, %c0_79, %c37] : memref<1x4x422xf32, #tpu.memory_space<vmem>>, vector<1x4x384xf32>
    %77 = vector.shape_cast %76 : vector<1x4x384xf32> to vector<4x384xf32>
    %cst_80 = arith.constant dense<0.000000e+00> : vector<4x384xf32>
    %78 = tpu.matmul %75, %77, %cst_80 {dimension_numbers = #tpu.dot_dimension_numbers<[1], [0], [0], [1], [0, 0, 1, 1], [], []>} : vector<4x4xf32>, vector<4x384xf32>, vector<4x384xf32> -> vector<4x384xf32>
    %c0_81 = arith.constant 0 : index
    %c0_82 = arith.constant 0 : index
    %c0_83 = arith.constant 0 : index
    %79 = vector.load %arg5[%c0_81, %c0_82, %c0_83] : memref<1x4x384xf32, #tpu.memory_space<vmem>>, vector<1x4x384xf32>
    %80 = vector.shape_cast %79 : vector<1x4x384xf32> to vector<4x384xf32>
    %81 = arith.addf %80, %78 : vector<4x384xf32>
    %c0_84 = arith.constant 0 : index
    %c0_85 = arith.constant 0 : index
    %c0_86 = arith.constant 0 : index
    %82 = vector.load %arg5[%c0_84, %c0_85, %c0_86] : memref<1x4x384xf32, #tpu.memory_space<vmem>>, vector<1x4x384xf32>
    %83 = vector.shape_cast %82 : vector<1x4x384xf32> to vector<4x384xf32>
    %84 = vector.shape_cast %81 : vector<4x384xf32> to vector<1x4x384xf32>
    tpu.vector_store %arg5[%c0_84, %c0_85, %c0_86], %84 {strides = array<i32>} : memref<1x4x384xf32, #tpu.memory_space<vmem>>, vector<1x4x384xf32>,
    %c8 = arith.constant 8 : index
    %c0_87 = arith.constant 0 : index
    %c0_88 = arith.constant 0 : index
    %85 = vector.load %arg2[%c8, %c0_87, %c0_88] : memref<9x4x4xf32, #tpu.memory_space<vmem>>, vector<1x4x4xf32>
    %86 = vector.shape_cast %85 : vector<1x4x4xf32> to vector<4x4xf32>
    %c0_89 = arith.constant 0 : index
    %c0_90 = arith.constant 0 : index
    %c38 = arith.constant 38 : index
    %87 = vector.load %arg1[%c0_89, %c0_90, %c38] : memref<1x4x422xf32, #tpu.memory_space<vmem>>, vector<1x4x384xf32>
    %88 = vector.shape_cast %87 : vector<1x4x384xf32> to vector<4x384xf32>
    %cst_91 = arith.constant dense<0.000000e+00> : vector<4x384xf32>
    %89 = tpu.matmul %86, %88, %cst_91 {dimension_numbers = #tpu.dot_dimension_numbers<[1], [0], [0], [1], [0, 0, 1, 1], [], []>} : vector<4x4xf32>, vector<4x384xf32>, vector<4x384xf32> -> vector<4x384xf32>
    %c0_92 = arith.constant 0 : index
    %c0_93 = arith.constant 0 : index
    %c0_94 = arith.constant 0 : index
    %90 = vector.load %arg5[%c0_92, %c0_93, %c0_94] : memref<1x4x384xf32, #tpu.memory_space<vmem>>, vector<1x4x384xf32>
    %91 = vector.shape_cast %90 : vector<1x4x384xf32> to vector<4x384xf32>
    %92 = arith.addf %91, %89 : vector<4x384xf32>
    %c0_95 = arith.constant 0 : index
    %c0_96 = arith.constant 0 : index
    %c0_97 = arith.constant 0 : index
    %93 = vector.load %arg5[%c0_95, %c0_96, %c0_97] : memref<1x4x384xf32, #tpu.memory_space<vmem>>, vector<1x4x384xf32>
    %94 = vector.shape_cast %93 : vector<1x4x384xf32> to vector<4x384xf32>
    %95 = vector.shape_cast %92 : vector<4x384xf32> to vector<1x4x384xf32>
    tpu.vector_store %arg5[%c0_95, %c0_96, %c0_97], %95 {strides = array<i32>} : memref<1x4x384xf32, #tpu.memory_space<vmem>>, vector<1x4x384xf32>,
    %c0_98 = arith.constant 0 : index
    %c0_99 = arith.constant 0 : index
    %96 = vector.load %arg3[%c0_98, %c0_99] : memref<4x1xf32, #tpu.memory_space<vmem>>, vector<4x1xf32>
    %c0_100 = arith.constant 0 : index
    %c0_101 = arith.constant 0 : index
    %c0_102 = arith.constant 0 : index
    %97 = vector.load %arg5[%c0_100, %c0_101, %c0_102] : memref<1x4x384xf32, #tpu.memory_space<vmem>>, vector<1x4x384xf32>
    %98 = vector.shape_cast %96 : vector<4x1xf32> to vector<1x4x1xf32>
    %99 = vector.broadcast %98 : vector<1x4x1xf32> to vector<1x4x384xf32>
    %100 = arith.addf %97, %99 : vector<1x4x384xf32>
    %c0_103 = arith.constant 0 : index
    %c0_104 = arith.constant 0 : index
    %c0_105 = arith.constant 0 : index
    %101 = vector.load %arg4[%c0_103, %c0_104, %c0_105] : memref<1x4x384xf32, #tpu.memory_space<vmem>>, vector<1x4x384xf32>
    tpu.vector_store %arg4[%c0_103, %c0_104, %c0_105], %100 {strides = array<i32>} : memref<1x4x384xf32, #tpu.memory_space<vmem>>, vector<1x4x384xf32>,
    return
  }
  func.func @transform_0(%arg0: i32) -> (i32, i32, i32) {
    %c0_i32 = arith.constant 0 : i32
    %c0_i32_0 = arith.constant 0 : i32
    %c0_i32_1 = arith.constant 0 : i32
    return %arg0, %c0_i32, %c0_i32_0 : i32, i32, i32
  }
  func.func @transform_1(%arg0: i32) -> (i32, i32, i32) {
    %c0_i32 = arith.constant 0 : i32
    %c0_i32_0 = arith.constant 0 : i32
    %c0_i32_1 = arith.constant 0 : i32
    %c0_i32_2 = arith.constant 0 : i32
    return %c0_i32, %c0_i32_0, %c0_i32_1 : i32, i32, i32
  }
  func.func @transform_2(%arg0: i32) -> (i32, i32) {
    %c0_i32 = arith.constant 0 : i32
    %c0_i32_0 = arith.constant 0 : i32
    %c0_i32_1 = arith.constant 0 : i32
    return %c0_i32, %c0_i32_0 : i32, i32
  }
  func.func @transform_3(%arg0: i32) -> (i32, i32, i32) {
    %c0_i32 = arith.constant 0 : i32
    %c0_i32_0 = arith.constant 0 : i32
    %c0_i32_1 = arith.constant 0 : i32
    return %arg0, %c0_i32, %c0_i32_0 : i32, i32, i32
  }
}

</mosaic_0001>

<llo_original>
// kernel: tpu_custom_call.1
$region0: #{tpu_custom_call.1}
  #allocation0 [shape = 'u32[]', space=smem, size = 0x4, offset = 0x4, fixed_abs, tag = 'smem constant byte address 0x4 - core index']
  #allocation1 [shape = 'u32[72,128]{1,0:T(1,128)}', space=vmem, size = 0x9000, scoped, tag = 'internal scratch']
  #allocation2 [shape = 'f32[1,4,384]{2,1,0:T(4,128)}', space=vmem, size = 0x1800, scoped, tag = 'scratch operand']
  %s0 = inlined_call_operand.vmem [shape: f32[2,4,422], index: 0, kind: input, shape index: {}]
  %s1 = inlined_call_operand.vmem [shape: f32[9,4,4], index: 1, kind: input, shape index: {}]
  %s2 = inlined_call_operand.vmem [shape: f32[4,1], index: 2, kind: input, shape index: {}]
  %s3 = inlined_call_operand.hbm [shape: f32[2,4,384], index: 3, kind: output, shape index: {}]
  %s4 = sld [smem:[#allocation0]]
  $region45: #{tpu_custom_call.1} parent=0
    _
  %s6 = ssub.s32 1, %s4
  %s7 = scalar_select 0, %s6, %s4
  $region1: #{tpu_custom_call.1} parent=0
    #allocation3 [shape = 'u8[12288]{0}', space=vmem, size = 0x3000, scoped, tag = 'output window, operand 0']
    #allocation4 [shape = 's32[2]{0}', space=sflag, size = 0x8, scoped, tag = 'scoped memory for tpu_custom_call.1']
    %8 = vsyncpa [#allocation4], 0
    %s9 = scalar_lea.sflag [#allocation4], 1
    %10 = vsyncpa %s9, 0
    loop: start=0, step=1, limit=4
    $region2: #{tpu_custom_call.1} parent=1 // loop_pre_header
      _
    $region3: #{tpu_custom_call.1} parent=1 // loop_header
      %s12 = sphi 0, %s16
      %p13 = scmp.ge.s32.totalorder %s12, 4
      %s22 = sphi 0, %s24
      %s25 = sphi 0, %s22
      %s26 = sphi 0, %s25
      %s42 = sphi 0, %s26
      %s46 = sphi 0, %s46
      %s48 = sphi 0, %s46
      %s49 = sphi 0, %s48
      %s63 = sphi 0, %s49
      %s67 = sphi 0, %s67
      %s69 = sphi 0, %s67
      %s70 = sphi 0, %s69
      %s84 = sphi 0, %s70
      %s90 = sphi 0, %s92
      %s93 = sphi 0, %s90
      %s94 = sphi 0, %s93
      %s110 = sphi 0, %s94
    $region4: #{tpu_custom_call.1} parent=1 // loop_header_branch
      %15 = sbr.rel (%p13) target = $region8
    $region5: #{tpu_custom_call.1} parent=1 // loop_body
      %s17 = ssub.s32 %s12, 1
      %s18 = ssub.s32 %s12, 2
      %s19 = sadd.s32 %s12, 1
      %s20 = ssub.s32 %s12, %s19
      %p21 = scmp.eq.s32.totalorder %s20, 0
      %s23 = sadd.s32 %s22, 1
      %s24 = scalar_select %p21, %s22, %s23
      %p27 = pneg %p21
      %p28 = scmp.eq.s32.totalorder %s12, 1
      %p29 = por %p27, %p28
      %p30 = scmp.ne.s32.totalorder %s22, %s25
      %p31 = scmp.eq.s32.totalorder %s12, 0
      %p32 = por %p30, %p31
      %p33 = scmp.ne.s32.totalorder %s22, %s25
      %p34 = scmp.eq.s32.totalorder %s17, 1
      %p35 = por %p33, %p34
      %p36 = scmp.ne.s32.totalorder %s25, %s26
      %p37 = scmp.eq.s32.totalorder %s17, 0
      %p38 = por %p36, %p37
      %p39 = scmp.ne.s32.totalorder %s25, %s26
      %p40 = scmp.eq.s32.totalorder %s18, 1
      %p41 = por %p39, %p40
      %p43 = scmp.ne.s32.totalorder %s26, %s42
      %p44 = scmp.eq.s32.totalorder %s18, 0
      %p45 = por %p43, %p44
      %s47 = sadd.s32 %s46, 1
      %p50 = scmp.eq.s32.totalorder %s12, 1
      %p51 = scmp.ne.s32.totalorder %s46, %s48
      %p52 = scmp.eq.s32.totalorder %s12, 0
      %p53 = por %p51, %p52
      %p54 = scmp.ne.s32.totalorder %s46, %s48
      %p55 = scmp.eq.s32.totalorder %s17, 1
      %p56 = por %p54, %p55
      %p57 = scmp.ne.s32.totalorder %s48, %s49
      %p58 = scmp.eq.s32.totalorder %s17, 0
      %p59 = por %p57, %p58
      %p60 = scmp.ne.s32.totalorder %s48, %s49
      %p61 = scmp.eq.s32.totalorder %s18, 1
      %p62 = por %p60, %p61
      %p64 = scmp.ne.s32.totalorder %s49, %s63
      %p65 = scmp.eq.s32.totalorder %s18, 0
      %p66 = por %p64, %p65
      %s68 = sadd.s32 %s67, 1
      %p71 = scmp.eq.s32.totalorder %s12, 1
      %p72 = scmp.ne.s32.totalorder %s67, %s69
      %p73 = scmp.eq.s32.totalorder %s12, 0
      %p74 = por %p72, %p73
      %p75 = scmp.ne.s32.totalorder %s67, %s69
      %p76 = scmp.eq.s32.totalorder %s17, 1
      %p77 = por %p75, %p76
      %p78 = scmp.ne.s32.totalorder %s69, %s70
      %p79 = scmp.eq.s32.totalorder %s17, 0
      %p80 = por %p78, %p79
      %p81 = scmp.ne.s32.totalorder %s69, %s70
      %p82 = scmp.eq.s32.totalorder %s18, 1
      %p83 = por %p81, %p82
      %p85 = scmp.ne.s32.totalorder %s70, %s84
      %p86 = scmp.eq.s32.totalorder %s18, 0
      %p87 = por %p85, %p86
      %s88 = ssub.s32 %s12, %s19
      %p89 = scmp.eq.s32.totalorder %s88, 0
      %s91 = sadd.s32 %s90, 1
      %s92 = scalar_select %p89, %s90, %s91
      %p95 = pneg %p89
      %p96 = scmp.eq.s32.totalorder %s12, 1
      %p97 = por %p95, %p96
      %p98 = scmp.ne.s32.totalorder %s90, %s93
      %p99 = scmp.eq.s32.totalorder %s12, 0
      %p100 = por %p98, %p99
      %p101 = scmp.ne.s32.totalorder %s90, %s93
      %p102 = scmp.eq.s32.totalorder %s17, 1
      %p103 = por %p101, %p102
      %p104 = scmp.ne.s32.totalorder %s93, %s94
      %p105 = scmp.eq.s32.totalorder %s17, 0
      %p106 = por %p104, %p105
      %p107 = scmp.ne.s32.totalorder %s93, %s94
      %p108 = scmp.eq.s32.totalorder %s18, 1
      %p109 = por %p107, %p108
      %p111 = scmp.ne.s32.totalorder %s94, %s110
      %p112 = scmp.eq.s32.totalorder %s18, 0
      %p113 = por %p111, %p112
      %p114 = scmp.le.s32.totalorder 1, %s12
      %p115 = scmp.lt.s32.totalorder %s12, 3
      %p116 = pnand %p114, %p115
      %p117 = pneg %p116
      // Predicated region
      $region9: #{tpu_custom_call.1} parent=5 // pred_check
        _
      $region10: #{tpu_custom_call.1} parent=5 // pred_check_branch
        %119 = sbr.rel (%p116) target = $region12
      $region11: #{tpu_custom_call.1} parent=5 // pred_region
        %s120 = ssub.s32 %s12, 1
        // Predicated region
        $region13: #{tpu_custom_call.1} parent=11 // pred_check
          %p121 = pneg %p59
        $region14: #{tpu_custom_call.1} parent=11 // pred_check_branch
          %123 = sbr.rel (%p121) target = $region16
        $region15: #{tpu_custom_call.1} parent=11 // pred_region
          _
        $region16: #{tpu_custom_call.1} parent=11 // pred_fallthru
          _
        // Predicated region
        $region17: #{tpu_custom_call.1} parent=11 // pred_check
          %p124 = pneg %p80
        $region18: #{tpu_custom_call.1} parent=11 // pred_check_branch
          %126 = sbr.rel (%p124) target = $region20
        $region19: #{tpu_custom_call.1} parent=11 // pred_region
          _
        $region20: #{tpu_custom_call.1} parent=11 // pred_fallthru
          _
      $region12: #{tpu_custom_call.1} parent=5 // pred_fallthru
        _
      %p127 = scmp.lt.s32.totalorder %s12, 2
      // Predicated region
      $region21: #{tpu_custom_call.1} parent=5 // pred_check
        %p128 = pneg %p127
      $region22: #{tpu_custom_call.1} parent=5 // pred_check_branch
        %130 = sbr.rel (%p128) target = $region24
      $region23: #{tpu_custom_call.1} parent=5 // pred_region
        // Predicated region
        $region25: #{tpu_custom_call.1} parent=23 // pred_check
          %p131 = pneg %p32
        $region26: #{tpu_custom_call.1} parent=23 // pred_check_branch
          %133 = sbr.rel (%p131) target = $region28
        $region27: #{tpu_custom_call.1} parent=23 // pred_region
          %p134 = scmp.lt.s32.totalorder %s12, 1
          %s135 = scalar_select %p134, %s12, 1
          %s136 = smul.addr %s135, 4
          %s137 = smul.addr %s136, 4
          %s138 = scalar_lea.vmem %s0, %s137
        $region28: #{tpu_custom_call.1} parent=23 // pred_fallthru
          _
      $region24: #{tpu_custom_call.1} parent=5 // pred_fallthru
        _
      %p139 = scmp.le.s32.totalorder 1, %s12
      %p140 = scmp.lt.s32.totalorder %s12, 3
      %p141 = pnand %p139, %p140
      %p142 = pneg %p141
      // Predicated region
      $region29: #{tpu_custom_call.1} parent=5 // pred_check
        _
      $region30: #{tpu_custom_call.1} parent=5 // pred_check_branch
        %144 = sbr.rel (%p141) target = $region32
      $region31: #{tpu_custom_call.1} parent=5 // pred_region
        %s145 = ssub.s32 %s12, 1
        %p146 = scmp.lt.s32.totalorder %s17, 1
        %s147 = scalar_select %p146, %s17, 1
        %s148 = smul.addr %s147, 4
        %s149 = smul.addr %s148, 4
        %s150 = scalar_lea.vmem %s0, %s149
        %p151 = pneg %p38
        %p152 = pneg %p35
        %p153 = pneg %p59
        %p154 = pneg %p56
        %p155 = pneg %p80
        %p156 = pneg %p77
        %p157 = pneg %p106
        %p158 = pneg %p103
        %s159 = sand.u32 %s93, 1
        %s160 = scalar_lea.sflag [#allocation4], %s159
        %s161 = sand.u32 %s93, 1
        %s162 = smul.addr %s161, 12
        %s163 = scalar_lea.vmem [#allocation3], %s162
        %p164 = scmp.lt.s32.totalorder %s17, 1
        %s165 = scalar_select %p164, %s17, 1
        %s166 = smul.addr %s165, 4
        %s167 = smul.addr %s166, 4
        %s168 = scalar_lea.vmem %s0, %s167
        %v169 = vld [vmem:[%s1] sm:$0xf]
        %v170 = vld [vmem:[%s168] sm:$0xff]
        %v171 = vld [vmem:[%s168 + $0x8] sm:$0xf]
        %174 = vst [vmem:[#allocation1] ss:$2 sm:$0xff] %v170
        %s175 = scalar_lea.vmem [#allocation1], 16
        %176 = vst [vmem:[%s175] ss:$2 sm:$0xff] %v171
        %v177 = vld.sshfl [vmem:[#allocation1] sm:$0xff pattern:$0x75316420]
        %v178 = vld.sshfl [vmem:[#allocation1 + $0x8] sm:$0xff pattern:$0x75316420]
        %v179 = vld.sshfl [vmem:[#allocation1 + $0x10] sm:$0xff pattern:$0x75316420]
        %vm180 = vcmask 31744
        %v182 = vsel %vm180, %v169, 0
        %vm184 = vcmask 1043456
        %v185 = vsel %vm184, %v177, 0
        %v187 = vsel %vm184, %v178, 0
        %v189 = vsel %vm184, %v179, 0
        %191 = vmatpush.msra.mxu0 0.0
        %192 = vmatpush.msra.mxu0 0.0
        %193 = vmatpush.msra.mxu0 0.0
        %194 = vmatpush.msra.mxu0 0.0
        %195 = vmatpush.msra.mxu0 0.0
        %196 = vmatpush.msra.mxu0 0.0
        %197 = vmatpush.msra.mxu0 0.0
        %198 = vmatpush.msra.mxu0 0.0
        %199 = vmatpush.msra.mxu0 0.0
        %200 = vmatpush.msra.mxu0 0.0
        %201 = vmatpush.msra.mxu0 0.0
        %202 = vmatpush.msra.mxu0 0.0
        %203 = vmatpush.msra.mxu0 0.0
        %204 = vmatpush.msra.mxu0 0.0
        %205 = vmatpush.msra.mxu0 0.0
        %206 = vmatpush.msra.mxu0 %v185
        %207 = vmatmul.f32.gmra.mxu0 %v182
        %v208 = vpop.f32.mrf.mxu0
        %v209 = vadd.f32 0.0, %v208
        %210 = vdwg.mxu0
        %211 = vmatpush.msra.mxu0 0.0
        %212 = vmatpush.msra.mxu0 0.0
        %213 = vmatpush.msra.mxu0 0.0
        %214 = vmatpush.msra.mxu0 0.0
        %215 = vmatpush.msra.mxu0 0.0
        %216 = vmatpush.msra.mxu0 0.0
        %217 = vmatpush.msra.mxu0 0.0
        %218 = vmatpush.msra.mxu0 0.0
        %219 = vmatpush.msra.mxu0 0.0
        %220 = vmatpush.msra.mxu0 0.0
        %221 = vmatpush.msra.mxu0 0.0
        %222 = vmatpush.msra.mxu0 0.0
        %223 = vmatpush.msra.mxu0 0.0
        %224 = vmatpush.msra.mxu0 0.0
        %225 = vmatpush.msra.mxu0 0.0
        %226 = vmatpush.msra.mxu0 %v187
        %227 = vmatmul.f32.gmra.mxu0 %v182
        %v228 = vpop.f32.mrf.mxu0
        %v229 = vadd.f32 0.0, %v228
        %230 = vdwg.mxu0
        %231 = vmatpush.msra.mxu0 0.0
        %232 = vmatpush.msra.mxu0 0.0
        %233 = vmatpush.msra.mxu0 0.0
        %234 = vmatpush.msra.mxu0 0.0
        %235 = vmatpush.msra.mxu0 0.0
        %236 = vmatpush.msra.mxu0 0.0
        %237 = vmatpush.msra.mxu0 0.0
        %238 = vmatpush.msra.mxu0 0.0
        %239 = vmatpush.msra.mxu0 0.0
        %240 = vmatpush.msra.mxu0 0.0
        %241 = vmatpush.msra.mxu0 0.0
        %242 = vmatpush.msra.mxu0 0.0
        %243 = vmatpush.msra.mxu0 0.0
        %244 = vmatpush.msra.mxu0 0.0
        %245 = vmatpush.msra.mxu0 0.0
        %246 = vmatpush.msra.mxu0 %v189
        %247 = vmatmul.f32.gmra.mxu0 %v182
        %v248 = vpop.f32.mrf.mxu0
        %v249 = vadd.f32 0.0, %v248
        %250 = vdwg.mxu0
        %v253 = vrot.slane %v229, 4
        %v254 = vsel %vm184, %v209, %v253
        %256 = vst [vmem:[#allocation2] sm:$0xff] %v254
        %257 = vst [vmem:[#allocation2 + $0x8] sm:$0xf] %v249
        %s258 = scalar_lea.vmem %s1, 4
        %v259 = vld [vmem:[%s258] sm:$0xf]
        %v260 = vld [vmem:[%s168] sm:$0xff]
        %v261 = vld [vmem:[%s168 + $0x8] sm:$0xff]
        %264 = vst [vmem:[#allocation1] ss:$2 sm:$0xff] %v260
        %s265 = scalar_lea.vmem [#allocation1], 16
        %266 = vst [vmem:[%s265] ss:$2 sm:$0xff] %v261
        %v267 = vld.sshfl [vmem:[#allocation1] sm:$0xff pattern:$0x75316420]
        %v268 = vld.sshfl [vmem:[#allocation1 + $0x8] sm:$0xff pattern:$0x75316420]
        %v269 = vld.sshfl [vmem:[#allocation1 + $0x10] sm:$0xff pattern:$0x75316420]
        %v270 = vld.sshfl [vmem:[#allocation1 + $0x18] sm:$0xff pattern:$0x75316420]
        %271 = vrot.lane.b32.xlu0 %v267, 127
        %v272 = vpop.permute.xlu0 %271
        %273 = vrot.lane.b32.xlu0 %v268, 127
        %v274 = vpop.permute.xlu0 %273
        %275 = vrot.lane.b32.xlu0 %v269, 127
        %v276 = vpop.permute.xlu0 %275
        %277 = vrot.lane.b32.xlu0 %v270, 127
        %v278 = vpop.permute.xlu0 %277
        %vm279 = vcmask 1039360
        %v280 = vsel %vm279, %v272, %v274
        %v281 = vsel %vm279, %v274, %v276
        %v282 = vsel %vm279, %v276, %v278
        %v284 = vsel %vm180, %v259, 0
        %v286 = vsel %vm184, %v280, 0
        %v288 = vsel %vm184, %v281, 0
        %v290 = vsel %vm184, %v282, 0
        %292 = vmatpush.msra.mxu0 0.0
        %293 = vmatpush.msra.mxu0 0.0
        %294 = vmatpush.msra.mxu0 0.0
        %295 = vmatpush.msra.mxu0 0.0
        %296 = vmatpush.msra.mxu0 0.0
        %297 = vmatpush.msra.mxu0 0.0
        %298 = vmatpush.msra.mxu0 0.0
        %299 = vmatpush.msra.mxu0 0.0
        %300 = vmatpush.msra.mxu0 0.0
        %301 = vmatpush.msra.mxu0 0.0
        %302 = vmatpush.msra.mxu0 0.0
        %303 = vmatpush.msra.mxu0 0.0
        %304 = vmatpush.msra.mxu0 0.0
        %305 = vmatpush.msra.mxu0 0.0
        %306 = vmatpush.msra.mxu0 0.0
        %307 = vmatpush.msra.mxu0 %v286
        %308 = vmatmul.f32.gmra.mxu0 %v284
        %v309 = vpop.f32.mrf.mxu0
        %v310 = vadd.f32 0.0, %v309
        %311 = vdwg.mxu0
        %312 = vmatpush.msra.mxu0 0.0
        %313 = vmatpush.msra.mxu0 0.0
        %314 = vmatpush.msra.mxu0 0.0
        %315 = vmatpush.msra.mxu0 0.0
        %316 = vmatpush.msra.mxu0 0.0
        %317 = vmatpush.msra.mxu0 0.0
        %318 = vmatpush.msra.mxu0 0.0
        %319 = vmatpush.msra.mxu0 0.0
        %320 = vmatpush.msra.mxu0 0.0
        %321 = vmatpush.msra.mxu0 0.0
        %322 = vmatpush.msra.mxu0 0.0
        %323 = vmatpush.msra.mxu0 0.0
        %324 = vmatpush.msra.mxu0 0.0
        %325 = vmatpush.msra.mxu0 0.0
        %326 = vmatpush.msra.mxu0 0.0
        %327 = vmatpush.msra.mxu0 %v288
        %328 = vmatmul.f32.gmra.mxu0 %v284
        %v329 = vpop.f32.mrf.mxu0
        %v330 = vadd.f32 0.0, %v329
        %331 = vdwg.mxu0
        %332 = vmatpush.msra.mxu0 0.0
        %333 = vmatpush.msra.mxu0 0.0
        %334 = vmatpush.msra.mxu0 0.0
        %335 = vmatpush.msra.mxu0 0.0
        %336 = vmatpush.msra.mxu0 0.0
        %337 = vmatpush.msra.mxu0 0.0
        %338 = vmatpush.msra.mxu0 0.0
        %339 = vmatpush.msra.mxu0 0.0
        %340 = vmatpush.msra.mxu0 0.0
        %341 = vmatpush.msra.mxu0 0.0
        %342 = vmatpush.msra.mxu0 0.0
        %343 = vmatpush.msra.mxu0 0.0
        %344 = vmatpush.msra.mxu0 0.0
        %345 = vmatpush.msra.mxu0 0.0
        %346 = vmatpush.msra.mxu0 0.0
        %347 = vmatpush.msra.mxu0 %v290
        %348 = vmatmul.f32.gmra.mxu0 %v284
        %v349 = vpop.f32.mrf.mxu0
        %v350 = vadd.f32 0.0, %v349
        %351 = vdwg.mxu0
        %v352 = vld [vmem:[#allocation2] sm:$0xff]
        %v353 = vld [vmem:[#allocation2 + $0x8] sm:$0xf]
        %v356 = vrot.slane %v330, 4
        %v357 = vsel %vm184, %v310, %v356
        %v359 = vadd.f32 %v352, %v357
        %v360 = vadd.f32 %v353, %v350
        %361 = vst [vmem:[#allocation2] sm:$0xff] %v359
        %362 = vst [vmem:[#allocation2 + $0x8] sm:$0xf] %v360
        %s363 = scalar_lea.vmem %s1, 8
        %v364 = vld [vmem:[%s363] sm:$0xf]
        %v365 = vld [vmem:[%s168] sm:$0xff]
        %v366 = vld [vmem:[%s168 + $0x8] sm:$0xff]
        %369 = vst [vmem:[#allocation1] ss:$2 sm:$0xff] %v365
        %s370 = scalar_lea.vmem [#allocation1], 16
        %371 = vst [vmem:[%s370] ss:$2 sm:$0xff] %v366
        %v372 = vld.sshfl [vmem:[#allocation1] sm:$0xff pattern:$0x75316420]
        %v373 = vld.sshfl [vmem:[#allocation1 + $0x8] sm:$0xff pattern:$0x75316420]
        %v374 = vld.sshfl [vmem:[#allocation1 + $0x10] sm:$0xff pattern:$0x75316420]
        %v375 = vld.sshfl [vmem:[#allocation1 + $0x18] sm:$0xff pattern:$0x75316420]
        %376 = vrot.lane.b32.xlu0 %v372, 126
        %v377 = vpop.permute.xlu0 %376
        %378 = vrot.lane.b32.xlu0 %v373, 126
        %v379 = vpop.permute.xlu0 %378
        %380 = vrot.lane.b32.xlu0 %v374, 126
        %v381 = vpop.permute.xlu0 %380
        %382 = vrot.lane.b32.xlu0 %v375, 126
        %v383 = vpop.permute.xlu0 %382
        %vm384 = vcmask 1031168
        %v385 = vsel %vm384, %v377, %v379
        %v386 = vsel %vm384, %v379, %v381
        %v387 = vsel %vm384, %v381, %v383
        %v389 = vsel %vm180, %v364, 0
        %v391 = vsel %vm184, %v385, 0
        %v393 = vsel %vm184, %v386, 0
        %v395 = vsel %vm184, %v387, 0
        %397 = vmatpush.msra.mxu0 0.0
        %398 = vmatpush.msra.mxu0 0.0
        %399 = vmatpush.msra.mxu0 0.0
        %400 = vmatpush.msra.mxu0 0.0
        %401 = vmatpush.msra.mxu0 0.0
        %402 = vmatpush.msra.mxu0 0.0
        %403 = vmatpush.msra.mxu0 0.0
        %404 = vmatpush.msra.mxu0 0.0
        %405 = vmatpush.msra.mxu0 0.0
        %406 = vmatpush.msra.mxu0 0.0
        %407 = vmatpush.msra.mxu0 0.0
        %408 = vmatpush.msra.mxu0 0.0
        %409 = vmatpush.msra.mxu0 0.0
        %410 = vmatpush.msra.mxu0 0.0
        %411 = vmatpush.msra.mxu0 0.0
        %412 = vmatpush.msra.mxu0 %v391
        %413 = vmatmul.f32.gmra.mxu0 %v389
        %v414 = vpop.f32.mrf.mxu0
        %v415 = vadd.f32 0.0, %v414
        %416 = vdwg.mxu0
        %417 = vmatpush.msra.mxu0 0.0
        %418 = vmatpush.msra.mxu0 0.0
        %419 = vmatpush.msra.mxu0 0.0
        %420 = vmatpush.msra.mxu0 0.0
        %421 = vmatpush.msra.mxu0 0.0
        %422 = vmatpush.msra.mxu0 0.0
        %423 = vmatpush.msra.mxu0 0.0
        %424 = vmatpush.msra.mxu0 0.0
        %425 = vmatpush.msra.mxu0 0.0
        %426 = vmatpush.msra.mxu0 0.0
        %427 = vmatpush.msra.mxu0 0.0
        %428 = vmatpush.msra.mxu0 0.0
        %429 = vmatpush.msra.mxu0 0.0
        %430 = vmatpush.msra.mxu0 0.0
        %431 = vmatpush.msra.mxu0 0.0
        %432 = vmatpush.msra.mxu0 %v393
        %433 = vmatmul.f32.gmra.mxu0 %v389
        %v434 = vpop.f32.mrf.mxu0
        %v435 = vadd.f32 0.0, %v434
        %436 = vdwg.mxu0
        %437 = vmatpush.msra.mxu0 0.0
        %438 = vmatpush.msra.mxu0 0.0
        %439 = vmatpush.msra.mxu0 0.0
        %440 = vmatpush.msra.mxu0 0.0
        %441 = vmatpush.msra.mxu0 0.0
        %442 = vmatpush.msra.mxu0 0.0
        %443 = vmatpush.msra.mxu0 0.0
        %444 = vmatpush.msra.mxu0 0.0
        %445 = vmatpush.msra.mxu0 0.0
        %446 = vmatpush.msra.mxu0 0.0
        %447 = vmatpush.msra.mxu0 0.0
        %448 = vmatpush.msra.mxu0 0.0
        %449 = vmatpush.msra.mxu0 0.0
        %450 = vmatpush.msra.mxu0 0.0
        %451 = vmatpush.msra.mxu0 0.0
        %452 = vmatpush.msra.mxu0 %v395
        %453 = vmatmul.f32.gmra.mxu0 %v389
        %v454 = vpop.f32.mrf.mxu0
        %v455 = vadd.f32 0.0, %v454
        %456 = vdwg.mxu0
        %v457 = vld [vmem:[#allocation2] sm:$0xff]
        %v458 = vld [vmem:[#allocation2 + $0x8] sm:$0xf]
        %v461 = vrot.slane %v435, 4
        %v462 = vsel %vm184, %v415, %v461
        %v464 = vadd.f32 %v457, %v462
        %v465 = vadd.f32 %v458, %v455
        %466 = vst [vmem:[#allocation2] sm:$0xff] %v464
        %467 = vst [vmem:[#allocation2 + $0x8] sm:$0xf] %v465
        %s468 = scalar_lea.vmem %s1, 12
        %v469 = vld [vmem:[%s468] sm:$0xf]
        %v470 = vld [vmem:[%s168] sm:$0xff]
        %v471 = vld [vmem:[%s168 + $0x8] sm:$0xff]
        %474 = vst [vmem:[#allocation1] ss:$2 sm:$0xff] %v470
        %s475 = scalar_lea.vmem [#allocation1], 16
        %476 = vst [vmem:[%s475] ss:$2 sm:$0xff] %v471
        %v477 = vld.sshfl [vmem:[#allocation1] sm:$0xff pattern:$0x75316420]
        %v478 = vld.sshfl [vmem:[#allocation1 + $0x8] sm:$0xff pattern:$0x75316420]
        %v479 = vld.sshfl [vmem:[#allocation1 + $0x10] sm:$0xff pattern:$0x75316420]
        %v480 = vld.sshfl [vmem:[#allocation1 + $0x18] sm:$0xff pattern:$0x75316420]
        %481 = vrot.lane.b32.xlu0 %v477, 110
        %v482 = vpop.permute.xlu0 %481
        %483 = vrot.lane.b32.xlu0 %v478, 110
        %v484 = vpop.permute.xlu0 %483
        %485 = vrot.lane.b32.xlu0 %v479, 110
        %v486 = vpop.permute.xlu0 %485
        %487 = vrot.lane.b32.xlu0 %v480, 110
        %v488 = vpop.permute.xlu0 %487
        %vm489 = vcmask 900096
        %v490 = vsel %vm489, %v482, %v484
        %v491 = vsel %vm489, %v484, %v486
        %v492 = vsel %vm489, %v486, %v488
        %v494 = vsel %vm180, %v469, 0
        %v496 = vsel %vm184, %v490, 0
        %v498 = vsel %vm184, %v491, 0
        %v500 = vsel %vm184, %v492, 0
        %502 = vmatpush.msra.mxu0 0.0
        %503 = vmatpush.msra.mxu0 0.0
        %504 = vmatpush.msra.mxu0 0.0
        %505 = vmatpush.msra.mxu0 0.0
        %506 = vmatpush.msra.mxu0 0.0
        %507 = vmatpush.msra.mxu0 0.0
        %508 = vmatpush.msra.mxu0 0.0
        %509 = vmatpush.msra.mxu0 0.0
        %510 = vmatpush.msra.mxu0 0.0
        %511 = vmatpush.msra.mxu0 0.0
        %512 = vmatpush.msra.mxu0 0.0
        %513 = vmatpush.msra.mxu0 0.0
        %514 = vmatpush.msra.mxu0 0.0
        %515 = vmatpush.msra.mxu0 0.0
        %516 = vmatpush.msra.mxu0 0.0
        %517 = vmatpush.msra.mxu0 %v496
        %518 = vmatmul.f32.gmra.mxu0 %v494
        %v519 = vpop.f32.mrf.mxu0
        %v520 = vadd.f32 0.0, %v519
        %521 = vdwg.mxu0
        %522 = vmatpush.msra.mxu0 0.0
        %523 = vmatpush.msra.mxu0 0.0
        %524 = vmatpush.msra.mxu0 0.0
        %525 = vmatpush.msra.mxu0 0.0
        %526 = vmatpush.msra.mxu0 0.0
        %527 = vmatpush.msra.mxu0 0.0
        %528 = vmatpush.msra.mxu0 0.0
        %529 = vmatpush.msra.mxu0 0.0
        %530 = vmatpush.msra.mxu0 0.0
        %531 = vmatpush.msra.mxu0 0.0
        %532 = vmatpush.msra.mxu0 0.0
        %533 = vmatpush.msra.mxu0 0.0
        %534 = vmatpush.msra.mxu0 0.0
        %535 = vmatpush.msra.mxu0 0.0
        %536 = vmatpush.msra.mxu0 0.0
        %537 = vmatpush.msra.mxu0 %v498
        %538 = vmatmul.f32.gmra.mxu0 %v494
        %v539 = vpop.f32.mrf.mxu0
        %v540 = vadd.f32 0.0, %v539
        %541 = vdwg.mxu0
        %542 = vmatpush.msra.mxu0 0.0
        %543 = vmatpush.msra.mxu0 0.0
        %544 = vmatpush.msra.mxu0 0.0
        %545 = vmatpush.msra.mxu0 0.0
        %546 = vmatpush.msra.mxu0 0.0
        %547 = vmatpush.msra.mxu0 0.0
        %548 = vmatpush.msra.mxu0 0.0
        %549 = vmatpush.msra.mxu0 0.0
        %550 = vmatpush.msra.mxu0 0.0
        %551 = vmatpush.msra.mxu0 0.0
        %552 = vmatpush.msra.mxu0 0.0
        %553 = vmatpush.msra.mxu0 0.0
        %554 = vmatpush.msra.mxu0 0.0
        %555 = vmatpush.msra.mxu0 0.0
        %556 = vmatpush.msra.mxu0 0.0
        %557 = vmatpush.msra.mxu0 %v500
        %558 = vmatmul.f32.gmra.mxu0 %v494
        %v559 = vpop.f32.mrf.mxu0
        %v560 = vadd.f32 0.0, %v559
        %561 = vdwg.mxu0
        %v562 = vld [vmem:[#allocation2] sm:$0xff]
        %v563 = vld [vmem:[#allocation2 + $0x8] sm:$0xf]
        %v566 = vrot.slane %v540, 4
        %v567 = vsel %vm184, %v520, %v566
        %v569 = vadd.f32 %v562, %v567
        %v570 = vadd.f32 %v563, %v560
        %571 = vst [vmem:[#allocation2] sm:$0xff] %v569
        %572 = vst [vmem:[#allocation2 + $0x8] sm:$0xf] %v570
        %s573 = scalar_lea.vmem %s1, 16
        %v574 = vld [vmem:[%s573] sm:$0xf]
        %v575 = vld [vmem:[%s168] sm:$0xff]
        %v576 = vld [vmem:[%s168 + $0x8] sm:$0xff]
        %579 = vst [vmem:[#allocation1] ss:$2 sm:$0xff] %v575
        %s580 = scalar_lea.vmem [#allocation1], 16
        %581 = vst [vmem:[%s580] ss:$2 sm:$0xff] %v576
        %v582 = vld.sshfl [vmem:[#allocation1] sm:$0xff pattern:$0x75316420]
        %v583 = vld.sshfl [vmem:[#allocation1 + $0x8] sm:$0xff pattern:$0x75316420]
        %v584 = vld.sshfl [vmem:[#allocation1 + $0x10] sm:$0xff pattern:$0x75316420]
        %v585 = vld.sshfl [vmem:[#allocation1 + $0x18] sm:$0xff pattern:$0x75316420]
        %586 = vrot.lane.b32.xlu0 %v582, 109
        %v587 = vpop.permute.xlu0 %586
        %588 = vrot.lane.b32.xlu0 %v583, 109
        %v589 = vpop.permute.xlu0 %588
        %590 = vrot.lane.b32.xlu0 %v584, 109
        %v591 = vpop.permute.xlu0 %590
        %592 = vrot.lane.b32.xlu0 %v585, 109
        %v593 = vpop.permute.xlu0 %592
        %vm594 = vcmask 891904
        %v595 = vsel %vm594, %v587, %v589
        %v596 = vsel %vm594, %v589, %v591
        %v597 = vsel %vm594, %v591, %v593
        %v599 = vsel %vm180, %v574, 0
        %v601 = vsel %vm184, %v595, 0
        %v603 = vsel %vm184, %v596, 0
        %v605 = vsel %vm184, %v597, 0
        %607 = vmatpush.msra.mxu0 0.0
        %608 = vmatpush.msra.mxu0 0.0
        %609 = vmatpush.msra.mxu0 0.0
        %610 = vmatpush.msra.mxu0 0.0
        %611 = vmatpush.msra.mxu0 0.0
        %612 = vmatpush.msra.mxu0 0.0
        %613 = vmatpush.msra.mxu0 0.0
        %614 = vmatpush.msra.mxu0 0.0
        %615 = vmatpush.msra.mxu0 0.0
        %616 = vmatpush.msra.mxu0 0.0
        %617 = vmatpush.msra.mxu0 0.0
        %618 = vmatpush.msra.mxu0 0.0
        %619 = vmatpush.msra.mxu0 0.0
        %620 = vmatpush.msra.mxu0 0.0
        %621 = vmatpush.msra.mxu0 0.0
        %622 = vmatpush.msra.mxu0 %v601
        %623 = vmatmul.f32.gmra.mxu0 %v599
        %v624 = vpop.f32.mrf.mxu0
        %v625 = vadd.f32 0.0, %v624
        %626 = vdwg.mxu0
        %627 = vmatpush.msra.mxu0 0.0
        %628 = vmatpush.msra.mxu0 0.0
        %629 = vmatpush.msra.mxu0 0.0
        %630 = vmatpush.msra.mxu0 0.0
        %631 = vmatpush.msra.mxu0 0.0
        %632 = vmatpush.msra.mxu0 0.0
        %633 = vmatpush.msra.mxu0 0.0
        %634 = vmatpush.msra.mxu0 0.0
        %635 = vmatpush.msra.mxu0 0.0
        %636 = vmatpush.msra.mxu0 0.0
        %637 = vmatpush.msra.mxu0 0.0
        %638 = vmatpush.msra.mxu0 0.0
        %639 = vmatpush.msra.mxu0 0.0
        %640 = vmatpush.msra.mxu0 0.0
        %641 = vmatpush.msra.mxu0 0.0
        %642 = vmatpush.msra.mxu0 %v603
        %643 = vmatmul.f32.gmra.mxu0 %v599
        %v644 = vpop.f32.mrf.mxu0
        %v645 = vadd.f32 0.0, %v644
        %646 = vdwg.mxu0
        %647 = vmatpush.msra.mxu0 0.0
        %648 = vmatpush.msra.mxu0 0.0
        %649 = vmatpush.msra.mxu0 0.0
        %650 = vmatpush.msra.mxu0 0.0
        %651 = vmatpush.msra.mxu0 0.0
        %652 = vmatpush.msra.mxu0 0.0
        %653 = vmatpush.msra.mxu0 0.0
        %654 = vmatpush.msra.mxu0 0.0
        %655 = vmatpush.msra.mxu0 0.0
        %656 = vmatpush.msra.mxu0 0.0
        %657 = vmatpush.msra.mxu0 0.0
        %658 = vmatpush.msra.mxu0 0.0
        %659 = vmatpush.msra.mxu0 0.0
        %660 = vmatpush.msra.mxu0 0.0
        %661 = vmatpush.msra.mxu0 0.0
        %662 = vmatpush.msra.mxu0 %v605
        %663 = vmatmul.f32.gmra.mxu0 %v599
        %v664 = vpop.f32.mrf.mxu0
        %v665 = vadd.f32 0.0, %v664
        %666 = vdwg.mxu0
        %v667 = vld [vmem:[#allocation2] sm:$0xff]
        %v668 = vld [vmem:[#allocation2 + $0x8] sm:$0xf]
        %v671 = vrot.slane %v645, 4
        %v672 = vsel %vm184, %v625, %v671
        %v674 = vadd.f32 %v667, %v672
        %v675 = vadd.f32 %v668, %v665
        %676 = vst [vmem:[#allocation2] sm:$0xff] %v674
        %677 = vst [vmem:[#allocation2 + $0x8] sm:$0xf] %v675
        %s678 = scalar_lea.vmem %s1, 20
        %v679 = vld [vmem:[%s678] sm:$0xf]
        %v680 = vld [vmem:[%s168] sm:$0xff]
        %v681 = vld [vmem:[%s168 + $0x8] sm:$0xff]
        %684 = vst [vmem:[#allocation1] ss:$2 sm:$0xff] %v680
        %s685 = scalar_lea.vmem [#allocation1], 16
        %686 = vst [vmem:[%s685] ss:$2 sm:$0xff] %v681
        %v687 = vld.sshfl [vmem:[#allocation1] sm:$0xff pattern:$0x75316420]
        %v688 = vld.sshfl [vmem:[#allocation1 + $0x8] sm:$0xff pattern:$0x75316420]
        %v689 = vld.sshfl [vmem:[#allocation1 + $0x10] sm:$0xff pattern:$0x75316420]
        %v690 = vld.sshfl [vmem:[#allocation1 + $0x18] sm:$0xff pattern:$0x75316420]
        %691 = vrot.lane.b32.xlu0 %v687, 108
        %v692 = vpop.permute.xlu0 %691
        %693 = vrot.lane.b32.xlu0 %v688, 108
        %v694 = vpop.permute.xlu0 %693
        %695 = vrot.lane.b32.xlu0 %v689, 108
        %v696 = vpop.permute.xlu0 %695
        %697 = vrot.lane.b32.xlu0 %v690, 108
        %v698 = vpop.permute.xlu0 %697
        %vm699 = vcmask 883712
        %v700 = vsel %vm699, %v692, %v694
        %v701 = vsel %vm699, %v694, %v696
        %v702 = vsel %vm699, %v696, %v698
        %v704 = vsel %vm180, %v679, 0
        %v706 = vsel %vm184, %v700, 0
        %v708 = vsel %vm184, %v701, 0
        %v710 = vsel %vm184, %v702, 0
        %712 = vmatpush.msra.mxu0 0.0
        %713 = vmatpush.msra.mxu0 0.0
        %714 = vmatpush.msra.mxu0 0.0
        %715 = vmatpush.msra.mxu0 0.0
        %716 = vmatpush.msra.mxu0 0.0
        %717 = vmatpush.msra.mxu0 0.0
        %718 = vmatpush.msra.mxu0 0.0
        %719 = vmatpush.msra.mxu0 0.0
        %720 = vmatpush.msra.mxu0 0.0
        %721 = vmatpush.msra.mxu0 0.0
        %722 = vmatpush.msra.mxu0 0.0
        %723 = vmatpush.msra.mxu0 0.0
        %724 = vmatpush.msra.mxu0 0.0
        %725 = vmatpush.msra.mxu0 0.0
        %726 = vmatpush.msra.mxu0 0.0
        %727 = vmatpush.msra.mxu0 %v706
        %728 = vmatmul.f32.gmra.mxu0 %v704
        %v729 = vpop.f32.mrf.mxu0
        %v730 = vadd.f32 0.0, %v729
        %731 = vdwg.mxu0
        %732 = vmatpush.msra.mxu0 0.0
        %733 = vmatpush.msra.mxu0 0.0
        %734 = vmatpush.msra.mxu0 0.0
        %735 = vmatpush.msra.mxu0 0.0
        %736 = vmatpush.msra.mxu0 0.0
        %737 = vmatpush.msra.mxu0 0.0
        %738 = vmatpush.msra.mxu0 0.0
        %739 = vmatpush.msra.mxu0 0.0
        %740 = vmatpush.msra.mxu0 0.0
        %741 = vmatpush.msra.mxu0 0.0
        %742 = vmatpush.msra.mxu0 0.0
        %743 = vmatpush.msra.mxu0 0.0
        %744 = vmatpush.msra.mxu0 0.0
        %745 = vmatpush.msra.mxu0 0.0
        %746 = vmatpush.msra.mxu0 0.0
        %747 = vmatpush.msra.mxu0 %v708
        %748 = vmatmul.f32.gmra.mxu0 %v704
        %v749 = vpop.f32.mrf.mxu0
        %v750 = vadd.f32 0.0, %v749
        %751 = vdwg.mxu0
        %752 = vmatpush.msra.mxu0 0.0
        %753 = vmatpush.msra.mxu0 0.0
        %754 = vmatpush.msra.mxu0 0.0
        %755 = vmatpush.msra.mxu0 0.0
        %756 = vmatpush.msra.mxu0 0.0
        %757 = vmatpush.msra.mxu0 0.0
        %758 = vmatpush.msra.mxu0 0.0
        %759 = vmatpush.msra.mxu0 0.0
        %760 = vmatpush.msra.mxu0 0.0
        %761 = vmatpush.msra.mxu0 0.0
        %762 = vmatpush.msra.mxu0 0.0
        %763 = vmatpush.msra.mxu0 0.0
        %764 = vmatpush.msra.mxu0 0.0
        %765 = vmatpush.msra.mxu0 0.0
        %766 = vmatpush.msra.mxu0 0.0
        %767 = vmatpush.msra.mxu0 %v710
        %768 = vmatmul.f32.gmra.mxu0 %v704
        %v769 = vpop.f32.mrf.mxu0
        %v770 = vadd.f32 0.0, %v769
        %771 = vdwg.mxu0
        %v772 = vld [vmem:[#allocation2] sm:$0xff]
        %v773 = vld [vmem:[#allocation2 + $0x8] sm:$0xf]
        %v776 = vrot.slane %v750, 4
        %v777 = vsel %vm184, %v730, %v776
        %v779 = vadd.f32 %v772, %v777
        %v780 = vadd.f32 %v773, %v770
        %781 = vst [vmem:[#allocation2] sm:$0xff] %v779
        %782 = vst [vmem:[#allocation2 + $0x8] sm:$0xf] %v780
        %s783 = scalar_lea.vmem %s1, 24
        %v784 = vld [vmem:[%s783] sm:$0xf]
        %v785 = vld [vmem:[%s168] sm:$0xff]
        %v786 = vld [vmem:[%s168 + $0x8] sm:$0xff]
        %789 = vst [vmem:[#allocation1] ss:$2 sm:$0xff] %v785
        %s790 = scalar_lea.vmem [#allocation1], 16
        %791 = vst [vmem:[%s790] ss:$2 sm:$0xff] %v786
        %v792 = vld.sshfl [vmem:[#allocation1] sm:$0xff pattern:$0x75316420]
        %v793 = vld.sshfl [vmem:[#allocation1 + $0x8] sm:$0xff pattern:$0x75316420]
        %v794 = vld.sshfl [vmem:[#allocation1 + $0x10] sm:$0xff pattern:$0x75316420]
        %v795 = vld.sshfl [vmem:[#allocation1 + $0x18] sm:$0xff pattern:$0x75316420]
        %796 = vrot.lane.b32.xlu0 %v792, 92
        %v797 = vpop.permute.xlu0 %796
        %798 = vrot.lane.b32.xlu0 %v793, 92
        %v799 = vpop.permute.xlu0 %798
        %800 = vrot.lane.b32.xlu0 %v794, 92
        %v801 = vpop.permute.xlu0 %800
        %802 = vrot.lane.b32.xlu0 %v795, 92
        %v803 = vpop.permute.xlu0 %802
        %vm804 = vcmask 752640
        %v805 = vsel %vm804, %v797, %v799
        %v806 = vsel %vm804, %v799, %v801
        %v807 = vsel %vm804, %v801, %v803
        %v809 = vsel %vm180, %v784, 0
        %v811 = vsel %vm184, %v805, 0
        %v813 = vsel %vm184, %v806, 0
        %v815 = vsel %vm184, %v807, 0
        %817 = vmatpush.msra.mxu0 0.0
        %818 = vmatpush.msra.mxu0 0.0
        %819 = vmatpush.msra.mxu0 0.0
        %820 = vmatpush.msra.mxu0 0.0
        %821 = vmatpush.msra.mxu0 0.0
        %822 = vmatpush.msra.mxu0 0.0
        %823 = vmatpush.msra.mxu0 0.0
        %824 = vmatpush.msra.mxu0 0.0
        %825 = vmatpush.msra.mxu0 0.0
        %826 = vmatpush.msra.mxu0 0.0
        %827 = vmatpush.msra.mxu0 0.0
        %828 = vmatpush.msra.mxu0 0.0
        %829 = vmatpush.msra.mxu0 0.0
        %830 = vmatpush.msra.mxu0 0.0
        %831 = vmatpush.msra.mxu0 0.0
        %832 = vmatpush.msra.mxu0 %v811
        %833 = vmatmul.f32.gmra.mxu0 %v809
        %v834 = vpop.f32.mrf.mxu0
        %v835 = vadd.f32 0.0, %v834
        %836 = vdwg.mxu0
        %837 = vmatpush.msra.mxu0 0.0
        %838 = vmatpush.msra.mxu0 0.0
        %839 = vmatpush.msra.mxu0 0.0
        %840 = vmatpush.msra.mxu0 0.0
        %841 = vmatpush.msra.mxu0 0.0
        %842 = vmatpush.msra.mxu0 0.0
        %843 = vmatpush.msra.mxu0 0.0
        %844 = vmatpush.msra.mxu0 0.0
        %845 = vmatpush.msra.mxu0 0.0
        %846 = vmatpush.msra.mxu0 0.0
        %847 = vmatpush.msra.mxu0 0.0
        %848 = vmatpush.msra.mxu0 0.0
        %849 = vmatpush.msra.mxu0 0.0
        %850 = vmatpush.msra.mxu0 0.0
        %851 = vmatpush.msra.mxu0 0.0
        %852 = vmatpush.msra.mxu0 %v813
        %853 = vmatmul.f32.gmra.mxu0 %v809
        %v854 = vpop.f32.mrf.mxu0
        %v855 = vadd.f32 0.0, %v854
        %856 = vdwg.mxu0
        %857 = vmatpush.msra.mxu0 0.0
        %858 = vmatpush.msra.mxu0 0.0
        %859 = vmatpush.msra.mxu0 0.0
        %860 = vmatpush.msra.mxu0 0.0
        %861 = vmatpush.msra.mxu0 0.0
        %862 = vmatpush.msra.mxu0 0.0
        %863 = vmatpush.msra.mxu0 0.0
        %864 = vmatpush.msra.mxu0 0.0
        %865 = vmatpush.msra.mxu0 0.0
        %866 = vmatpush.msra.mxu0 0.0
        %867 = vmatpush.msra.mxu0 0.0
        %868 = vmatpush.msra.mxu0 0.0
        %869 = vmatpush.msra.mxu0 0.0
        %870 = vmatpush.msra.mxu0 0.0
        %871 = vmatpush.msra.mxu0 0.0
        %872 = vmatpush.msra.mxu0 %v815
        %873 = vmatmul.f32.gmra.mxu0 %v809
        %v874 = vpop.f32.mrf.mxu0
        %v875 = vadd.f32 0.0, %v874
        %876 = vdwg.mxu0
        %v877 = vld [vmem:[#allocation2] sm:$0xff]
        %v878 = vld [vmem:[#allocation2 + $0x8] sm:$0xf]
        %v881 = vrot.slane %v855, 4
        %v882 = vsel %vm184, %v835, %v881
        %v884 = vadd.f32 %v877, %v882
        %v885 = vadd.f32 %v878, %v875
        %886 = vst [vmem:[#allocation2] sm:$0xff] %v884
        %887 = vst [vmem:[#allocation2 + $0x8] sm:$0xf] %v885
        %s888 = scalar_lea.vmem %s1, 28
        %v889 = vld [vmem:[%s888] sm:$0xf]
        %v890 = vld [vmem:[%s168] sm:$0xff]
        %v891 = vld [vmem:[%s168 + $0x8] sm:$0xff]
        %894 = vst [vmem:[#allocation1] ss:$2 sm:$0xff] %v890
        %s895 = scalar_lea.vmem [#allocation1], 16
        %896 = vst [vmem:[%s895] ss:$2 sm:$0xff] %v891
        %v897 = vld.sshfl [vmem:[#allocation1] sm:$0xff pattern:$0x75316420]
        %v898 = vld.sshfl [vmem:[#allocation1 + $0x8] sm:$0xff pattern:$0x75316420]
        %v899 = vld.sshfl [vmem:[#allocation1 + $0x10] sm:$0xff pattern:$0x75316420]
        %v900 = vld.sshfl [vmem:[#allocation1 + $0x18] sm:$0xff pattern:$0x75316420]
        %901 = vrot.lane.b32.xlu0 %v897, 91
        %v902 = vpop.permute.xlu0 %901
        %903 = vrot.lane.b32.xlu0 %v898, 91
        %v904 = vpop.permute.xlu0 %903
        %905 = vrot.lane.b32.xlu0 %v899, 91
        %v906 = vpop.permute.xlu0 %905
        %907 = vrot.lane.b32.xlu0 %v900, 91
        %v908 = vpop.permute.xlu0 %907
        %vm909 = vcmask 744448
        %v910 = vsel %vm909, %v902, %v904
        %v911 = vsel %vm909, %v904, %v906
        %v912 = vsel %vm909, %v906, %v908
        %v914 = vsel %vm180, %v889, 0
        %v916 = vsel %vm184, %v910, 0
        %v918 = vsel %vm184, %v911, 0
        %v920 = vsel %vm184, %v912, 0
        %922 = vmatpush.msra.mxu0 0.0
        %923 = vmatpush.msra.mxu0 0.0
        %924 = vmatpush.msra.mxu0 0.0
        %925 = vmatpush.msra.mxu0 0.0
        %926 = vmatpush.msra.mxu0 0.0
        %927 = vmatpush.msra.mxu0 0.0
        %928 = vmatpush.msra.mxu0 0.0
        %929 = vmatpush.msra.mxu0 0.0
        %930 = vmatpush.msra.mxu0 0.0
        %931 = vmatpush.msra.mxu0 0.0
        %932 = vmatpush.msra.mxu0 0.0
        %933 = vmatpush.msra.mxu0 0.0
        %934 = vmatpush.msra.mxu0 0.0
        %935 = vmatpush.msra.mxu0 0.0
        %936 = vmatpush.msra.mxu0 0.0
        %937 = vmatpush.msra.mxu0 %v916
        %938 = vmatmul.f32.gmra.mxu0 %v914
        %v939 = vpop.f32.mrf.mxu0
        %v940 = vadd.f32 0.0, %v939
        %941 = vdwg.mxu0
        %942 = vmatpush.msra.mxu0 0.0
        %943 = vmatpush.msra.mxu0 0.0
        %944 = vmatpush.msra.mxu0 0.0
        %945 = vmatpush.msra.mxu0 0.0
        %946 = vmatpush.msra.mxu0 0.0
        %947 = vmatpush.msra.mxu0 0.0
        %948 = vmatpush.msra.mxu0 0.0
        %949 = vmatpush.msra.mxu0 0.0
        %950 = vmatpush.msra.mxu0 0.0
        %951 = vmatpush.msra.mxu0 0.0
        %952 = vmatpush.msra.mxu0 0.0
        %953 = vmatpush.msra.mxu0 0.0
        %954 = vmatpush.msra.mxu0 0.0
        %955 = vmatpush.msra.mxu0 0.0
        %956 = vmatpush.msra.mxu0 0.0
        %957 = vmatpush.msra.mxu0 %v918
        %958 = vmatmul.f32.gmra.mxu0 %v914
        %v959 = vpop.f32.mrf.mxu0
        %v960 = vadd.f32 0.0, %v959
        %961 = vdwg.mxu0
        %962 = vmatpush.msra.mxu0 0.0
        %963 = vmatpush.msra.mxu0 0.0
        %964 = vmatpush.msra.mxu0 0.0
        %965 = vmatpush.msra.mxu0 0.0
        %966 = vmatpush.msra.mxu0 0.0
        %967 = vmatpush.msra.mxu0 0.0
        %968 = vmatpush.msra.mxu0 0.0
        %969 = vmatpush.msra.mxu0 0.0
        %970 = vmatpush.msra.mxu0 0.0
        %971 = vmatpush.msra.mxu0 0.0
        %972 = vmatpush.msra.mxu0 0.0
        %973 = vmatpush.msra.mxu0 0.0
        %974 = vmatpush.msra.mxu0 0.0
        %975 = vmatpush.msra.mxu0 0.0
        %976 = vmatpush.msra.mxu0 0.0
        %977 = vmatpush.msra.mxu0 %v920
        %978 = vmatmul.f32.gmra.mxu0 %v914
        %v979 = vpop.f32.mrf.mxu0
        %v980 = vadd.f32 0.0, %v979
        %981 = vdwg.mxu0
        %v982 = vld [vmem:[#allocation2] sm:$0xff]
        %v983 = vld [vmem:[#allocation2 + $0x8] sm:$0xf]
        %v986 = vrot.slane %v960, 4
        %v987 = vsel %vm184, %v940, %v986
        %v989 = vadd.f32 %v982, %v987
        %v990 = vadd.f32 %v983, %v980
        %991 = vst [vmem:[#allocation2] sm:$0xff] %v989
        %992 = vst [vmem:[#allocation2 + $0x8] sm:$0xf] %v990
        %s993 = scalar_lea.vmem %s1, 32
        %v994 = vld [vmem:[%s993] sm:$0xf]
        %v995 = vld [vmem:[%s168] sm:$0xff]
        %v996 = vld [vmem:[%s168 + $0x8] sm:$0xff]
        %999 = vst [vmem:[#allocation1] ss:$2 sm:$0xff] %v995
        %s1000 = scalar_lea.vmem [#allocation1], 16
        %1001 = vst [vmem:[%s1000] ss:$2 sm:$0xff] %v996
        %v1002 = vld.sshfl [vmem:[#allocation1] sm:$0xff pattern:$0x75316420]
        %v1003 = vld.sshfl [vmem:[#allocation1 + $0x8] sm:$0xff pattern:$0x75316420]
        %v1004 = vld.sshfl [vmem:[#allocation1 + $0x10] sm:$0xff pattern:$0x75316420]
        %v1005 = vld.sshfl [vmem:[#allocation1 + $0x18] sm:$0xff pattern:$0x75316420]
        %1006 = vrot.lane.b32.xlu0 %v1002, 90
        %v1007 = vpop.permute.xlu0 %1006
        %1008 = vrot.lane.b32.xlu0 %v1003, 90
        %v1009 = vpop.permute.xlu0 %1008
        %1010 = vrot.lane.b32.xlu0 %v1004, 90
        %v1011 = vpop.permute.xlu0 %1010
        %1012 = vrot.lane.b32.xlu0 %v1005, 90
        %v1013 = vpop.permute.xlu0 %1012
        %vm1014 = vcmask 736256
        %v1015 = vsel %vm1014, %v1007, %v1009
        %v1016 = vsel %vm1014, %v1009, %v1011
        %v1017 = vsel %vm1014, %v1011, %v1013
        %v1019 = vsel %vm180, %v994, 0
        %v1021 = vsel %vm184, %v1015, 0
        %v1023 = vsel %vm184, %v1016, 0
        %v1025 = vsel %vm184, %v1017, 0
        %1027 = vmatpush.msra.mxu0 0.0
        %1028 = vmatpush.msra.mxu0 0.0
        %1029 = vmatpush.msra.mxu0 0.0
        %1030 = vmatpush.msra.mxu0 0.0
        %1031 = vmatpush.msra.mxu0 0.0
        %1032 = vmatpush.msra.mxu0 0.0
        %1033 = vmatpush.msra.mxu0 0.0
        %1034 = vmatpush.msra.mxu0 0.0
        %1035 = vmatpush.msra.mxu0 0.0
        %1036 = vmatpush.msra.mxu0 0.0
        %1037 = vmatpush.msra.mxu0 0.0
        %1038 = vmatpush.msra.mxu0 0.0
        %1039 = vmatpush.msra.mxu0 0.0
        %1040 = vmatpush.msra.mxu0 0.0
        %1041 = vmatpush.msra.mxu0 0.0
        %1042 = vmatpush.msra.mxu0 %v1021
        %1043 = vmatmul.f32.gmra.mxu0 %v1019
        %v1044 = vpop.f32.mrf.mxu0
        %v1045 = vadd.f32 0.0, %v1044
        %1046 = vdwg.mxu0
        %1047 = vmatpush.msra.mxu0 0.0
        %1048 = vmatpush.msra.mxu0 0.0
        %1049 = vmatpush.msra.mxu0 0.0
        %1050 = vmatpush.msra.mxu0 0.0
        %1051 = vmatpush.msra.mxu0 0.0
        %1052 = vmatpush.msra.mxu0 0.0
        %1053 = vmatpush.msra.mxu0 0.0
        %1054 = vmatpush.msra.mxu0 0.0
        %1055 = vmatpush.msra.mxu0 0.0
        %1056 = vmatpush.msra.mxu0 0.0
        %1057 = vmatpush.msra.mxu0 0.0
        %1058 = vmatpush.msra.mxu0 0.0
        %1059 = vmatpush.msra.mxu0 0.0
        %1060 = vmatpush.msra.mxu0 0.0
        %1061 = vmatpush.msra.mxu0 0.0
        %1062 = vmatpush.msra.mxu0 %v1023
        %1063 = vmatmul.f32.gmra.mxu0 %v1019
        %v1064 = vpop.f32.mrf.mxu0
        %v1065 = vadd.f32 0.0, %v1064
        %1066 = vdwg.mxu0
        %1067 = vmatpush.msra.mxu0 0.0
        %1068 = vmatpush.msra.mxu0 0.0
        %1069 = vmatpush.msra.mxu0 0.0
        %1070 = vmatpush.msra.mxu0 0.0
        %1071 = vmatpush.msra.mxu0 0.0
        %1072 = vmatpush.msra.mxu0 0.0
        %1073 = vmatpush.msra.mxu0 0.0
        %1074 = vmatpush.msra.mxu0 0.0
        %1075 = vmatpush.msra.mxu0 0.0
        %1076 = vmatpush.msra.mxu0 0.0
        %1077 = vmatpush.msra.mxu0 0.0
        %1078 = vmatpush.msra.mxu0 0.0
        %1079 = vmatpush.msra.mxu0 0.0
        %1080 = vmatpush.msra.mxu0 0.0
        %1081 = vmatpush.msra.mxu0 0.0
        %1082 = vmatpush.msra.mxu0 %v1025
        %1083 = vmatmul.f32.gmra.mxu0 %v1019
        %v1084 = vpop.f32.mrf.mxu0
        %v1085 = vadd.f32 0.0, %v1084
        %1086 = vdwg.mxu0
        %v1087 = vld [vmem:[#allocation2] sm:$0xff]
        %v1088 = vld [vmem:[#allocation2 + $0x8] sm:$0xf]
        %v1091 = vrot.slane %v1065, 4
        %v1092 = vsel %vm184, %v1045, %v1091
        %v1094 = vadd.f32 %v1087, %v1092
        %v1095 = vadd.f32 %v1088, %v1085
        %1096 = vst [vmem:[#allocation2] sm:$0xff] %v1094
        %1097 = vst [vmem:[#allocation2 + $0x8] sm:$0xf] %v1095
        %v1098 = vld [vmem:[%s2] sm:$0xf]
        %v1099 = vld [vmem:[#allocation2] sm:$0xff]
        %v1100 = vld [vmem:[#allocation2 + $0x8] sm:$0xf]
        %1102 = vset.pattern.permute.xlu0 0
        %1103 = vperm.xlu0 %1102, %v1098
        %v1104 = vpop.permute.xlu0 %1103
        %v1106 = vunpack.c.l.s4 839922192
        %v1107 = vunpack.c.0.s8 %v1106
        %v1108 = vperm.slane %v1104, %v1107
        %v1110 = vadd.f32 %v1099, %v1108
        %v1111 = vadd.f32 %v1100, %v1108
        %1112 = vst [vmem:[%s163] sm:$0xff] %v1110
        %1113 = vst [vmem:[%s163 + $0x8] sm:$0xf] %v1111
        %s1114 = sand.u32 %s93, 1
        %s1115 = scalar_lea.sflag [#allocation4], %s1114
        %s1116 = sand.u32 %s93, 1
        %s1117 = smul.addr %s1116, 12
        %s1118 = scalar_lea.vmem [#allocation3], %s1117
        // Predicated region
        $region33: #{tpu_custom_call.1} parent=31 // pred_check
          %p1119 = pneg %p103
        $region34: #{tpu_custom_call.1} parent=31 // pred_check_branch
          %1121 = sbr.rel (%p1119) target = $region36
        $region35: #{tpu_custom_call.1} parent=31 // pred_region
          %1123 = vsyncadd %s1115, 0
          %s1124 = smul.addr %s17, 3
          %s1125 = smul.addr %s1124, 4
          %s1126 = scalar_lea.hbm %s3, %s1125
          %s1128 = sshll.u32 %s1118, 4
          %s1129 = int_to_ptr.vmem [resolvable:$true] %s1128
          %s1130 = sshll.u32 %s1126, 4
          %s1131 = int_to_ptr.hbm [resolvable:$true] %s1130
          %1133 = dma.vmem_to_hbm [thread:$0]  %s1129, 192, %s1131, %s1115
        $region36: #{tpu_custom_call.1} parent=31 // pred_fallthru
          _
      $region32: #{tpu_custom_call.1} parent=5 // pred_fallthru
        _
      %p1134 = scmp.le.s32.totalorder 2, %s12
      // Predicated region
      $region37: #{tpu_custom_call.1} parent=5 // pred_check
        %p1135 = pneg %p1134
      $region38: #{tpu_custom_call.1} parent=5 // pred_check_branch
        %1137 = sbr.rel (%p1135) target = $region40
      $region39: #{tpu_custom_call.1} parent=5 // pred_region
        %s1138 = ssub.s32 %s12, 2
        // Predicated region
        $region41: #{tpu_custom_call.1} parent=39 // pred_check
          %p1139 = pneg %p109
        $region42: #{tpu_custom_call.1} parent=39 // pred_check_branch
          %1141 = sbr.rel (%p1139) target = $region44
        $region43: #{tpu_custom_call.1} parent=39 // pred_region
          %s1142 = sand.u32 %s94, 1
          %s1143 = scalar_lea.sflag [#allocation4], %s1142
          %s1144 = sand.u32 %s94, 1
          %s1145 = smul.addr %s1144, 12
          %s1146 = scalar_lea.vmem [#allocation3], %s1145
          %1148 = dma.done %s1143, 192
        $region44: #{tpu_custom_call.1} parent=39 // pred_fallthru
          _
      $region40: #{tpu_custom_call.1} parent=5 // pred_fallthru
        _
    $region6: #{tpu_custom_call.1} parent=1 // loop_footer
      %s16 = sadd.s32 1, %s12
    $region7: #{tpu_custom_call.1} parent=1 // loop_footer_branch
      %11 = sbr.rel target = $region3
    $region8: #{tpu_custom_call.1} parent=1 // loop_exit
      _
    %1149 = vsyncpa [#allocation4], 1
    %s1150 = scalar_lea.sflag [#allocation4], 1
    %1151 = vsyncpa %s1150, 1

</llo_original>
